<compile_context>
chip_gen: v7x
topology: tpu7x:2x2x1
jax: 0.10.0
libtpu: 0.0.40
codegen_flags: <defaults>
</compile_context>

<pallas_src>
import functools

import jax
import jax.numpy as jnp
from jax.experimental import pallas as pl
from jax.experimental.pallas import tpu as pltpu


def _round_up(x, m):
    return ((x + m - 1) // m) * m


def _plan(N, C):
    """Tile size T (=TM=TK), padded node count, padded channel count."""
    CP = _round_up(max(C, 1), 128)
    n128 = _round_up(max(N, 1), 128)
    T = 128
    for t in (512, 256, 128):
        if n128 >= 2 * t:          # guarantees >=2 row tiles whenever possible (v7x)
            T = t
            break
    N_pad = _round_up(max(N, 1), T)
    return T, N_pad, CP


# ---------------------------------------------------------------------------
# Kernel 1: GRU weight evolution    W_new = GRUCell(x = W_prev, h = W_prev)
# Single fused matmul; fused weight column layout: [r | z | n_input | n_hidden]
# Also emits the zero-padded (CP, CP) bf16 weight used by the aggregation.
# ---------------------------------------------------------------------------
def _gru_weight_kernel(w_prev_ref, wf_ref, bf_ref, w_new_ref, w_pad_ref, *, C, CP):
    w_prev = w_prev_ref[...]                                          # (C, C) f32
    g = jnp.dot(w_prev, wf_ref[...],
                preferred_element_type=jnp.float32) + bf_ref[...]     # (C, 4C)
    r = jax.nn.sigmoid(g[:, 0:C])
    z = jax.nn.sigmoid(g[:, C:2 * C])
    n = jnp.tanh(g[:, 2 * C:3 * C] + r * g[:, 3 * C:4 * C])
    w_new = (1.0 - z) * n + z * w_prev
    w_new_ref[...] = w_new

    if CP > C:
        top = jnp.concatenate(
            [w_new, jnp.zeros((C, CP - C), jnp.float32)], axis=1)      # (C, CP)
        w_pad = jnp.concatenate(
            [top, jnp.zeros((CP - C, CP), jnp.float32)], axis=0)       # (CP, CP)
    else:
        w_pad = w_new
    w_pad_ref[...] = w_pad.astype(jnp.bfloat16)


# ---------------------------------------------------------------------------
# Kernel 2: tiled GCN aggregation   out = (A_norm @ X) @ W
# grid = (row tiles, reduction tiles); one matmul per step, W applied once per
# row tile in the epilogue; f32 VMEM accumulator.
# ---------------------------------------------------------------------------
def _gcn_agg_kernel(w_ref, x_ref, a_ref, out_ref, acc_ref, *, TK, x_resident):
    k = pl.program_id(1)

    @pl.when(k == 0)
    def _():
        acc_ref[...] = jnp.zeros_like(acc_ref)

    a = a_ref[...].astype(jnp.bfloat16)                  # no-op if already bf16
    if x_resident:
        start = pl.multiple_of(k * TK, TK)
        x = x_ref[pl.ds(start, TK), :]
    else:
        x = x_ref[...]
    x = x.astype(jnp.bfloat16)

    # (TM, TK) bf16 @ (TK, CP) bf16 -> f32 accumulate
    acc_ref[...] += jnp.dot(a, x, preferred_element_type=jnp.float32)

    @pl.when(k == pl.num_programs(1) - 1)
    def _():
        # (TM, CP) @ (CP, CP) once per row tile; lane-dense f32 store.
        out_ref[...] = jnp.dot(acc_ref[...].astype(jnp.bfloat16), w_ref[...],
                               preferred_element_type=jnp.float32
                               ).astype(out_ref.dtype)


# ---------------------------------------------------------------------------
# Wrappers
# ---------------------------------------------------------------------------
def fuse_gru_params(w_ih, w_hh, b_ih, b_hh):
    """PyTorch-layout GRU params -> fused (C, 4C) matrix and (1, 4C) bias.

    Valid because EvolveGCNO always feeds the same tensor as GRU input and
    hidden state, so the r/z gate matmuls can be pre-summed.
    Column blocks: [W_ir+W_hr | W_iz+W_hz | W_in | W_hn].
    """
    C = w_ih.shape[1]
    wf = jnp.concatenate(
        [(w_ih[0:C] + w_hh[0:C]).T,
         (w_ih[C:2 * C] + w_hh[C:2 * C]).T,
         w_ih[2 * C:3 * C].T,
         w_hh[2 * C:3 * C].T], axis=1)                                # (C, 4C)
    bf = jnp.concatenate(
        [b_ih[0:C] + b_hh[0:C],
         b_ih[C:2 * C] + b_hh[C:2 * C],
         b_ih[2 * C:3 * C],
         b_hh[2 * C:3 * C]])[None, :]                                 # (1, 4C)
    return wf, bf


def _evolve_gcno_forward(X, A_norm, weight_prev, gru_fused):
    """One EvolveGCNO forward step.

    X:        (N, C) or pre-padded (N, CP); any float dtype (bf16 recommended).
    A_norm:   (N, N) dense normalized adjacency (bf16 recommended, pre-padded
              to a tile multiple if possible - see build_dense_gcn_norm).
    Returns (node_out f32 (N, C), new_weight f32 (C, C)).
    """
    C = weight_prev.shape[0]
    N = A_norm.shape[0]
    T, N_pad, CP = _plan(N, C)
    wf, bf = gru_fused

    # ---- Stage 1: evolve the (C, C) weight with the fused GRU kernel (f32) ----
    vmem = pl.BlockSpec(memory_space=pltpu.MemorySpace.VMEM)
    new_w, w_pad = pl.pallas_call(
        functools.partial(_gru_weight_kernel, C=C, CP=CP),
        out_shape=(jax.ShapeDtypeStruct((C, C), jnp.float32),
                   jax.ShapeDtypeStruct((CP, CP), jnp.bfloat16)),
        in_specs=[vmem, vmem, vmem],
        out_specs=(vmem, vmem),
    )(weight_prev, wf, bf)

    # ---- Stage 2: padding glue (no-ops when caller provides padded inputs) ----
    a_p = A_norm
    if a_p.shape != (N_pad, N_pad):
        a_p = jnp.pad(a_p, ((0, N_pad - a_p.shape[0]), (0, N_pad - a_p.shape[1])))
    x_p = X
    if x_p.shape != (N_pad, CP):
        x_p = jnp.pad(x_p, ((0, N_pad - x_p.shape[0]), (0, CP - x_p.shape[1])))

    a_bytes = a_p.dtype.itemsize
    x_bytes = x_p.dtype.itemsize
    TM = TK = T
    grid = (N_pad // TM, N_pad // TK)

    # Hold X fully resident in VMEM when it is small; otherwise tile along k.
    x_resident = (N_pad * CP * x_bytes) <= (8 << 20)
    if x_resident:
        x_spec = pl.BlockSpec((N_pad, CP), lambda i, k: (0, 0))
        x_buf_bytes = 2 * N_pad * CP * x_bytes
        x_hbm_bytes = N_pad * CP * x_bytes
    else:
        x_spec = pl.BlockSpec((TK, CP), lambda i, k: (k, 0))
        x_buf_bytes = 2 * TK * CP * x_bytes
        x_hbm_bytes = grid[0] * N_pad * CP * x_bytes

    # VMEM budget from the actual padded tile shapes; cap per-chip.
    tile_bytes = (2 * TM * TK * a_bytes          # double-buffered A tiles
                  + x_buf_bytes                  # X (resident or tiled)
                  + 2 * CP * CP * 2              # resident W (bf16)
                  + 2 * TM * CP * 4              # double-buffered f32 out
                  + TM * CP * 4)                 # f32 accumulator
    try:
        phys = int(getattr(pltpu.get_tpu_info(), "vmem_capacity_bytes", 64 << 20))
    except Exception:
        phys = 64 << 20
    cap = min(96 << 20, (phys * 3) // 4)         # ~96 MiB on v5e/v6e, ~48 MiB on v7x
    vmem_limit = int(min(max(2 * tile_bytes, 32 << 20), cap))

    cost = pl.CostEstimate(
        flops=2 * N_pad * N_pad * CP + 2 * N_pad * CP * CP,
        transcendentals=0,
        bytes_accessed=(N_pad * N_pad * a_bytes + x_hbm_bytes
                        + CP * CP * 2 + N_pad * CP * 4),
    )

    out = pl.pallas_call(
        functools.partial(_gcn_agg_kernel, TK=TK, x_resident=x_resident),
        out_shape=jax.ShapeDtypeStruct((N_pad, CP), jnp.float32),
        grid_spec=pltpu.PrefetchScalarGridSpec(
            num_scalar_prefetch=0,
            grid=grid,
            in_specs=[
                pl.BlockSpec((CP, CP), lambda i, k: (0, 0)),     # W (VMEM resident)
                x_spec,                                          # X
                pl.BlockSpec((TM, TK), lambda i, k: (i, k)),     # A_norm tile
            ],
            out_specs=pl.BlockSpec((TM, CP), lambda i, k: (i, 0)),
            scratch_shapes=[pltpu.VMEM((TM, CP), jnp.float32)],
        ),
        compiler_params=pltpu.CompilerParams(
            dimension_semantics=("parallel", "arbitrary"),
            vmem_limit_bytes=vmem_limit,
        ),
        cost_estimate=cost,
    )(w_pad, x_p, a_p)

    return out[:N, :C], new_w


evolve_gcno_forward = jax.jit(_evolve_gcno_forward)


# ---------------------------------------------------------------------------
# Glue + references (plain JAX)
# ---------------------------------------------------------------------------
def build_dense_gcn_norm(edge_index, num_nodes, edge_weight=None, improved=False,
                         pad_to=None, dtype=jnp.bfloat16):
    """Dense equivalent of torch_geometric gcn_norm (irregular scatter glue).

    Emits the matrix directly in `dtype` (bf16 recommended) and optionally
    already padded to `pad_to` rows/cols so the kernel needs no extra HBM pass.
    """
    src, dst = edge_index[0], edge_index[1]
    if edge_weight is None:
        edge_weight = jnp.ones((src.shape[0],), jnp.float32)
    fill = 2.0 if improved else 1.0
    n = num_nodes if pad_to is None else pad_to
    A_hat = jnp.zeros((n, n), jnp.float32).at[src, dst].add(edge_weight)
    diag = fill * (jnp.arange(n) < num_nodes).astype(jnp.float32)
    A_hat = A_hat + jnp.diag(diag)
    deg = A_hat.sum(axis=0)                              # incoming degree (col sum)
    dinv = jnp.where(deg > 0, jax.lax.rsqrt(deg), 0.0)
    # M[i, j] = dinv[i] * A_hat[j, i] * dinv[j];  out = M @ X @ W
    return (dinv[:, None] * A_hat.T * dinv[None, :]).astype(dtype)


def init_params(key, C):
    """Glorot initial_weight + uniform GRU params in PyTorch layout."""
    k_iw, k_wih, k_whh, k_bih, k_bhh = jax.random.split(key, 5)
    glorot_a = (6.0 / (C + C)) ** 0.5
    initial_weight = jax.random.uniform(k_iw, (C, C), jnp.float32, -glorot_a, glorot_a)
    gru_a = (1.0 / C) ** 0.5
    w_ih = jax.random.uniform(k_wih, (3 * C, C), jnp.float32, -gru_a, gru_a)
    w_hh = jax.random.uniform(k_whh, (3 * C, C), jnp.float32, -gru_a, gru_a)
    b_ih = jax.random.uniform(k_bih, (3 * C,), jnp.float32, -gru_a, gru_a)
    b_hh = jax.random.uniform(k_bhh, (3 * C,), jnp.float32, -gru_a, gru_a)
    return initial_weight, (w_ih, w_hh, b_ih, b_hh)


_HI = jax.lax.Precision.HIGHEST


def reference_forward(X, A_norm, weight_prev, gru_params):
    """Pure-JAX f32 reference (PyTorch GRU gate order r, z, n)."""
    w_ih, w_hh, b_ih, b_hh = gru_params
    C = weight_prev.shape[0]
    gi = jnp.dot(weight_prev, w_ih.T, precision=_HI) + b_ih
    gh = jnp.dot(weight_prev, w_hh.T, precision=_HI) + b_hh
    r = jax.nn.sigmoid(gi[:, :C] + gh[:, :C])
    z = jax.nn.sigmoid(gi[:, C:2 * C] + gh[:, C:2 * C])
    n = jnp.tanh(gi[:, 2 * C:] + r * gh[:, 2 * C:])
    W = (1.0 - z) * n + z * weight_prev
    out = jnp.dot(A_norm, jnp.dot(X, W, precision=_HI), precision=_HI)
    return out, W


def reference_aggregate_bf16(X, A_norm, W):
    """bf16-operand / f32-accumulation reference matching the kernel's
    reassociated order out = (A @ X) @ W."""
    f32 = jnp.float32
    a_b = A_norm.astype(jnp.bfloat16).astype(f32)
    x_b = X.astype(jnp.bfloat16).astype(f32)
    w_b = W.astype(jnp.bfloat16).astype(f32)
    ax = jnp.dot(a_b, x_b, precision=_HI)
    return jnp.dot(ax.astype(jnp.bfloat16).astype(f32), w_b, precision=_HI)


if __name__ == "__main__":
    C = 32   # in_channels
    N = 64   # number of nodes

    key = jax.random.PRNGKey(0)
    k_param, k_x, k_edge = jax.random.split(key, 3)

    initial_weight, gru_params = init_params(k_param, C)
    gru_fused = fuse_gru_params(*gru_params)
    X = jax.random.normal(k_x, (N, C), jnp.float32)

    # Deterministic small graph: ring in both directions + a few random edges.
    ring_src = jnp.arange(N, dtype=jnp.int32)
    ring_dst = (ring_src + 1) % N
    extra_src = jax.random.randint(k_edge, (32,), 0, N, jnp.int32)
    extra_dst = (extra_src + 7) % N
    src = jnp.concatenate([ring_src, ring_dst, extra_src])
    dst = jnp.concatenate([ring_dst, ring_src, extra_dst])
    edge_index = jnp.stack([src, dst])  # (2, E), edge_weight = None (ones)

    # Production path: dense normalized adjacency emitted directly in bf16,
    # already padded to the tile multiple (no host-side cast/pad pass).
    T, N_pad, CP = _plan(N, C)
    A_bf = build_dense_gcn_norm(edge_index, N, pad_to=N_pad)            # bf16 padded
    A_f32 = build_dense_gcn_norm(edge_index, N, dtype=jnp.float32)      # f32 for refs
    X_pad = jnp.pad(X.astype(jnp.bfloat16), ((0, N_pad - N), (0, CP - C)))

    # References (f32 path and bf16-faithful path in the kernel's assoc order).
    ref_out_f32, ref_w = reference_forward(X, A_f32, initial_weight, gru_params)
    ref_out_bf16 = reference_aggregate_bf16(X, A_f32, ref_w)

    out_p, new_weight = evolve_gcno_forward(X_pad, A_bf, initial_weight, gru_fused)
    out_p = jax.block_until_ready(out_p)
    new_weight = jax.block_until_ready(new_weight)
    out = out_p[:N]

    # Evolved weight: pure f32 path, tight tolerance.
    assert jnp.allclose(new_weight, ref_w, atol=1e-4, rtol=1e-4)
    # Aggregation: bf16 operands / f32 accumulation vs faithful bf16 reference...
    assert jnp.allclose(out, ref_out_bf16, atol=1e-2, rtol=1e-2)
    # ...and vs the full-f32 reference with bf16-rounding headroom.
    assert jnp.allclose(out, ref_out_f32, atol=5e-2, rtol=5e-2)

    # Second step uses the evolved weight as both GRU input and hidden state,
    # matching `self.recurrent_layer(self.weight, self.weight)`.
    ref_out2, ref_w2 = reference_forward(X, A_f32, ref_w, gru_params)
    out2_p, new_weight2 = evolve_gcno_forward(X_pad, A_bf, new_weight, gru_fused)
    out2_p = jax.block_until_ready(out2_p)
    new_weight2 = jax.block_until_ready(new_weight2)
    assert jnp.allclose(new_weight2, ref_w2, atol=1e-4, rtol=1e-4)
    assert jnp.allclose(out2_p[:N], ref_out2, atol=5e-2, rtol=5e-2)

    # TODO(synk): if the surrounding model processes many temporal snapshots,
    # batch them into one pallas_call to amortize the GRU-kernel launch.
    print("KERNEL_OK")
</pallas_src>

<mosaic_0001>
module attributes {stable_mosaic.version = 11 : i64} {
  func.func @_gcn_agg_kernel(%arg0: i32, %arg1: i32, %arg2: memref<128x128xbf16, #tpu.memory_space<vmem>>, %arg3: memref<128x128xbf16, #tpu.memory_space<vmem>>, %arg4: memref<128x128xbf16, #tpu.memory_space<vmem>>, %arg5: memref<128x128xf32, #tpu.memory_space<vmem>>, %arg6: memref<128x128xf32, #tpu.memory_space<vmem>>) attributes {dimension_semantics = [#tpu.dimension_semantics<parallel>, #tpu.dimension_semantics<arbitrary>], iteration_bounds = array<i64: 1, 1>, scalar_prefetch = 0 : i64, scratch_operands = 1 : i64, tpu.core_type = #tpu.core_type<tc>, window_params = [{pipeline_mode = #tpu.pipeline_mode<synchronous>, transform_indices = @transform_0, window_bounds = array<i64: 128, 128>}, {pipeline_mode = #tpu.pipeline_mode<synchronous>, transform_indices = @transform_1, window_bounds = array<i64: 128, 128>}, {transform_indices = @transform_2, window_bounds = array<i64: 128, 128>}, {transform_indices = @transform_3, window_bounds = array<i64: 128, 128>}]} {
    %c0_i32 = arith.constant 0 : i32
    %0 = arith.cmpi eq, %arg1, %c0_i32 : i32
    %1 = arith.extui %0 : i1 to i32
    %c0_i32_0 = arith.constant 0 : i32
    %2 = arith.cmpi ne, %1, %c0_i32_0 : i32
    scf.if %2 {
      %cst_9 = arith.constant 0.000000e+00 : f32
      %15 = vector.broadcast %cst_9 : f32 to vector<128x128xf32>
      %c0_10 = arith.constant 0 : index
      %c0_11 = arith.constant 0 : index
      %16 = vector.load %arg6[%c0_10, %c0_11] : memref<128x128xf32, #tpu.memory_space<vmem>>, vector<128x128xf32>
      tpu.vector_store %arg6[%c0_10, %c0_11], %15 {strides = array<i32>} : memref<128x128xf32, #tpu.memory_space<vmem>>, vector<128x128xf32>,
    } else {
    }
    %c0 = arith.constant 0 : index
    %c0_1 = arith.constant 0 : index
    %3 = vector.load %arg4[%c0, %c0_1] : memref<128x128xbf16, #tpu.memory_space<vmem>>, vector<128x128xbf16>
    %c128_i32 = arith.constant 128 : i32
    %4 = arith.muli %arg1, %c128_i32 : i32
    %5 = tpu.assume_multiple %4, 128 : i32
    %6 = arith.index_cast %5 : i32 to index
    %c0_2 = arith.constant 0 : index
    %7 = vector.load %arg3[%6, %c0_2] : memref<128x128xbf16, #tpu.memory_space<vmem>>, vector<128x128xbf16>
    %c0_3 = arith.constant 0 : index
    %c0_4 = arith.constant 0 : index
    %8 = vector.load %arg6[%c0_3, %c0_4] : memref<128x128xf32, #tpu.memory_space<vmem>>, vector<128x128xf32>
    %cst = arith.constant dense<0.000000e+00> : vector<128x128xf32>
    %9 = tpu.matmul %3, %7, %cst {dimension_numbers = #tpu.dot_dimension_numbers<[1], [0], [0], [1], [0, 0, 1, 1], [], []>} : vector<128x128xbf16>, vector<128x128xbf16>, vector<128x128xf32> -> vector<128x128xf32>
    %10 = arith.addf %8, %9 : vector<128x128xf32>
    %c0_5 = arith.constant 0 : index
    %c0_6 = arith.constant 0 : index
    %11 = vector.load %arg6[%c0_5, %c0_6] : memref<128x128xf32, #tpu.memory_space<vmem>>, vector<128x128xf32>
    tpu.vector_store %arg6[%c0_5, %c0_6], %10 {strides = array<i32>} : memref<128x128xf32, #tpu.memory_space<vmem>>, vector<128x128xf32>,
    %c0_i32_7 = arith.constant 0 : i32
    %12 = arith.cmpi eq, %arg1, %c0_i32_7 : i32
    %13 = arith.extui %12 : i1 to i32
    %c0_i32_8 = arith.constant 0 : i32
    %14 = arith.cmpi ne, %13, %c0_i32_8 : i32
    scf.if %14 {
      %c0_9 = arith.constant 0 : index
      %c0_10 = arith.constant 0 : index
      %15 = vector.load %arg6[%c0_9, %c0_10] : memref<128x128xf32, #tpu.memory_space<vmem>>, vector<128x128xf32>
      %16 = arith.truncf %15 : vector<128x128xf32> to vector<128x128xbf16>
      %c0_11 = arith.constant 0 : index
      %c0_12 = arith.constant 0 : index
      %17 = vector.load %arg2[%c0_11, %c0_12] : memref<128x128xbf16, #tpu.memory_space<vmem>>, vector<128x128xbf16>
      %cst_13 = arith.constant dense<0.000000e+00> : vector<128x128xf32>
      %18 = tpu.matmul %16, %17, %cst_13 {dimension_numbers = #tpu.dot_dimension_numbers<[1], [0], [0], [1], [0, 0, 1, 1], [], []>} : vector<128x128xbf16>, vector<128x128xbf16>, vector<128x128xf32> -> vector<128x128xf32>
      %c0_14 = arith.constant 0 : index
      %c0_15 = arith.constant 0 : index
      %19 = vector.load %arg5[%c0_14, %c0_15] : memref<128x128xf32, #tpu.memory_space<vmem>>, vector<128x128xf32>
      tpu.vector_store %arg5[%c0_14, %c0_15], %18 {strides = array<i32>} : memref<128x128xf32, #tpu.memory_space<vmem>>, vector<128x128xf32>,
    } else {
    }
    return
  }
  func.func @transform_0(%arg0: i32, %arg1: i32) -> (i32, i32) {
    %c0_i32 = arith.constant 0 : i32
    %c0_i32_0 = arith.constant 0 : i32
    %c0_i32_1 = arith.constant 0 : i32
    return %c0_i32, %c0_i32_0 : i32, i32
  }
  func.func @transform_1(%arg0: i32, %arg1: i32) -> (i32, i32) {
    %c0_i32 = arith.constant 0 : i32
    %c0_i32_0 = arith.constant 0 : i32
    %c0_i32_1 = arith.constant 0 : i32
    return %c0_i32, %c0_i32_0 : i32, i32
  }
  func.func @transform_2(%arg0: i32, %arg1: i32) -> (i32, i32) {
    %c0_i32 = arith.constant 0 : i32
    return %arg0, %arg1 : i32, i32
  }
  func.func @transform_3(%arg0: i32, %arg1: i32) -> (i32, i32) {
    %c0_i32 = arith.constant 0 : i32
    %c0_i32_0 = arith.constant 0 : i32
    return %arg0, %c0_i32 : i32, i32
  }
}

module attributes {stable_mosaic.version = 11 : i64} {
  func.func @_gru_weight_kernel(%arg0: memref<32x32xf32, #tpu.memory_space<vmem>>, %arg1: memref<32x128xf32, #tpu.memory_space<vmem>>, %arg2: memref<1x128xf32, #tpu.memory_space<vmem>>, %arg3: memref<32x32xf32, #tpu.memory_space<vmem>>, %arg4: memref<128x128xbf16, #tpu.memory_space<vmem>>) attributes {dimension_semantics = [], scalar_prefetch = 0 : i64, scratch_operands = 0 : i64, tpu.core_type = #tpu.core_type<tc>} {
    %c0 = arith.constant 0 : index
    %c0_0 = arith.constant 0 : index
    %0 = vector.load %arg0[%c0, %c0_0] : memref<32x32xf32, #tpu.memory_space<vmem>>, vector<32x32xf32>
    %c0_1 = arith.constant 0 : index
    %c0_2 = arith.constant 0 : index
    %1 = vector.load %arg1[%c0_1, %c0_2] : memref<32x128xf32, #tpu.memory_space<vmem>>, vector<32x128xf32>
    %cst = arith.constant dense<0.000000e+00> : vector<32x128xf32>
    %2 = tpu.matmul %0, %1, %cst {dimension_numbers = #tpu.dot_dimension_numbers<[1], [0], [0], [1], [0, 0, 1, 1], [], []>} : vector<32x32xf32>, vector<32x128xf32>, vector<32x128xf32> -> vector<32x128xf32>
    %c0_3 = arith.constant 0 : index
    %c0_4 = arith.constant 0 : index
    %3 = vector.load %arg2[%c0_3, %c0_4] : memref<1x128xf32, #tpu.memory_space<vmem>>, vector<1x128xf32>
    %4 = vector.broadcast %3 : vector<1x128xf32> to vector<32x128xf32>
    %5 = arith.addf %2, %4 : vector<32x128xf32>
    %6 = vector.extract_strided_slice %5 {offsets = [0, 0], sizes = [32, 32], strides = [1, 1]} : vector<32x128xf32> to vector<32x32xf32>
    %7 = arith.negf %6 : vector<32x32xf32>
    %8 = math.exp %7 : vector<32x32xf32>
    %cst_5 = arith.constant 1.000000e+00 : f32
    %9 = vector.broadcast %cst_5 : f32 to vector<32x32xf32>
    %10 = arith.addf %9, %8 : vector<32x32xf32>
    %11 = arith.divf %9, %10 : vector<32x32xf32>
    %12 = vector.extract_strided_slice %5 {offsets = [0, 32], sizes = [32, 32], strides = [1, 1]} : vector<32x128xf32> to vector<32x32xf32>
    %13 = arith.negf %12 : vector<32x32xf32>
    %14 = math.exp %13 : vector<32x32xf32>
    %cst_6 = arith.constant 1.000000e+00 : f32
    %15 = vector.broadcast %cst_6 : f32 to vector<32x32xf32>
    %16 = arith.addf %15, %14 : vector<32x32xf32>
    %17 = arith.divf %15, %16 : vector<32x32xf32>
    %18 = vector.extract_strided_slice %5 {offsets = [0, 64], sizes = [32, 32], strides = [1, 1]} : vector<32x128xf32> to vector<32x32xf32>
    %19 = vector.extract_strided_slice %5 {offsets = [0, 96], sizes = [32, 32], strides = [1, 1]} : vector<32x128xf32> to vector<32x32xf32>
    %20 = arith.mulf %11, %19 : vector<32x32xf32>
    %21 = arith.addf %18, %20 : vector<32x32xf32>
    %22 = math.tanh %21 : vector<32x32xf32>
    %cst_7 = arith.constant 1.000000e+00 : f32
    %23 = vector.broadcast %cst_7 : f32 to vector<32x32xf32>
    %24 = arith.subf %23, %17 : vector<32x32xf32>
    %25 = arith.mulf %24, %22 : vector<32x32xf32>
    %26 = arith.mulf %17, %0 : vector<32x32xf32>
    %27 = arith.addf %25, %26 : vector<32x32xf32>
    %c0_8 = arith.constant 0 : index
    %c0_9 = arith.constant 0 : index
    %28 = vector.load %arg3[%c0_8, %c0_9] : memref<32x32xf32, #tpu.memory_space<vmem>>, vector<32x32xf32>
    tpu.vector_store %arg3[%c0_8, %c0_9], %27 {strides = array<i32>} : memref<32x32xf32, #tpu.memory_space<vmem>>, vector<32x32xf32>,
    %cst_10 = arith.constant 0.000000e+00 : f32
    %29 = vector.broadcast %cst_10 : f32 to vector<32x96xf32>
    %30 = tpu.concatenate %27, %29 in 1 : vector<32x32xf32>, vector<32x96xf32> -> vector<32x128xf32>
    %cst_11 = arith.constant 0.000000e+00 : f32
    %31 = vector.broadcast %cst_11 : f32 to vector<96x128xf32>
    %32 = tpu.concatenate %30, %31 in 0 : vector<32x128xf32>, vector<96x128xf32> -> vector<128x128xf32>
    %33 = arith.truncf %32 : vector<128x128xf32> to vector<128x128xbf16>
    %c0_12 = arith.constant 0 : index
    %c0_13 = arith.constant 0 : index
    %34 = vector.load %arg4[%c0_12, %c0_13] : memref<128x128xbf16, #tpu.memory_space<vmem>>, vector<128x128xbf16>
    tpu.vector_store %arg4[%c0_12, %c0_13], %33 {strides = array<i32>} : memref<128x128xbf16, #tpu.memory_space<vmem>>, vector<128x128xbf16>,
    return
  }
}

</mosaic_0001>

<llo_original>
// kernel: _evolve_gcno_forward.2
$region0: #{_evolve_gcno_forward.2}
  #allocation0 [shape = 'u32[]', space=smem, size = 0x4, offset = 0x4, fixed_abs, tag = 'smem constant byte address 0x4 - core index']
  #allocation1 [shape = 'u32[144,128]{1,0:T(1,128)}', space=vmem, size = 0x12000, scoped, tag = 'internal scratch']
  %s0 = inlined_call_operand.hbm [shape: f32[32,32], index: 0, kind: input, shape index: {}]
  %s1 = inlined_call_operand.hbm [shape: f32[32,128], index: 1, kind: input, shape index: {}]
  %s2 = inlined_call_operand.vmem [shape: f32[1,128], index: 2, kind: input, shape index: {}]
  %s3 = inlined_call_operand.hbm [shape: f32[32,32], index: 3, kind: output, shape index: {0}]
  %s4 = inlined_call_operand.vmem [shape: bf16[128,128], index: 4, kind: output, shape index: {1}]
  %5 = xla_tuple %s3, %s4
  %s6 = sld [smem:[#allocation0]]
  $region38: #{_evolve_gcno_forward.2} parent=0
    _
  %s8 = ssub.s32 1, %s6
  %s9 = scalar_select 0, %s8, %s6
  $region1: #{_evolve_gcno_forward.2} parent=0
    #allocation2 [shape = 'u8[16384]{0}', space=vmem, size = 0x4000, scoped, tag = 'input window, operand 0, single buffered']
    #allocation3 [shape = 's32[1]{0}', space=sflag, size = 0x4, scoped, tag = 'scoped memory for _evolve_gcno_forward.2']
    #allocation4 [shape = 's32[1]{0}', space=sflag, size = 0x4, scoped, tag = 'scoped memory for _evolve_gcno_forward.2']
    #allocation5 [shape = 'u8[16384]{0}', space=vmem, size = 0x4000, scoped, tag = 'input window, operand 1, single buffered']
    #allocation6 [shape = 's32[1]{0}', space=sflag, size = 0x4, scoped, tag = 'scoped memory for _evolve_gcno_forward.2']
    #allocation7 [shape = 'u8[16384]{0}', space=vmem, size = 0x4000, scoped, tag = 'output window, operand 0, single buffered']
    %10 = vsyncpa [#allocation3], 0
    %11 = vsyncpa [#allocation6], 0
    %12 = vsyncpa [#allocation4], 0
    // Predicated region
    $region2: #{_evolve_gcno_forward.2} parent=1 // pred_check
      _
    $region3: #{_evolve_gcno_forward.2} parent=1 // pred_check_branch
      %14 = sbr.rel (0) target = $region5
    $region4: #{_evolve_gcno_forward.2} parent=1 // pred_region
      %s16 = ssub.s32 512, 512
      %17 = vsyncadd [#allocation3], %s16
      %s18 = sshll.u32 [#allocation2], 4
      %s19 = int_to_ptr.vmem [resolvable:$true] %s18
      %24 = dma.hbm_to_vmem [thread:$0]  %s0, 512, %s19, [#allocation3], 128, 128, 8
    $region5: #{_evolve_gcno_forward.2} parent=1 // pred_fallthru
      _
    // Predicated region
    $region6: #{_evolve_gcno_forward.2} parent=1 // pred_check
      _
    $region7: #{_evolve_gcno_forward.2} parent=1 // pred_check_branch
      %26 = sbr.rel (0) target = $region9
    $region8: #{_evolve_gcno_forward.2} parent=1 // pred_region
      %s28 = ssub.s32 512, 512
      %29 = vsyncadd [#allocation6], %s28
      %s30 = sshll.u32 [#allocation5], 4
      %s31 = int_to_ptr.vmem [resolvable:$true] %s30
      %36 = dma.hbm_to_vmem [thread:$0]  %s1, 512, %s31, [#allocation6], 128, 128, 8
    $region9: #{_evolve_gcno_forward.2} parent=1 // pred_fallthru
      _
    // Predicated region
    $region10: #{_evolve_gcno_forward.2} parent=1 // pred_check
      _
    $region11: #{_evolve_gcno_forward.2} parent=1 // pred_check_branch
      %38 = sbr.rel (0) target = $region13
    $region12: #{_evolve_gcno_forward.2} parent=1 // pred_region
      _
    $region13: #{_evolve_gcno_forward.2} parent=1 // pred_fallthru
      _
    // Predicated region
    $region14: #{_evolve_gcno_forward.2} parent=1 // pred_check
      _
    $region15: #{_evolve_gcno_forward.2} parent=1 // pred_check_branch
      %40 = sbr.rel (0) target = $region17
    $region16: #{_evolve_gcno_forward.2} parent=1 // pred_region
      %41 = dma.done [#allocation3], 512
    $region17: #{_evolve_gcno_forward.2} parent=1 // pred_fallthru
      _
    // Predicated region
    $region18: #{_evolve_gcno_forward.2} parent=1 // pred_check
      _
    $region19: #{_evolve_gcno_forward.2} parent=1 // pred_check_branch
      %43 = sbr.rel (0) target = $region21
    $region20: #{_evolve_gcno_forward.2} parent=1 // pred_region
      %44 = dma.done [#allocation6], 512
    $region21: #{_evolve_gcno_forward.2} parent=1 // pred_fallthru
      _
    %v45 = vld [vmem:[#allocation2] sm:$0xff]
    %v46 = vld [vmem:[#allocation2 + $0x8] sm:$0xff]
    %v47 = vld [vmem:[#allocation2 + $0x10] sm:$0xff]
    %v48 = vld [vmem:[#allocation2 + $0x18] sm:$0xff]
    %v49 = vld [vmem:[#allocation5] sm:$0xff]
    %v50 = vld [vmem:[#allocation5 + $0x8] sm:$0xff]
    %v51 = vld [vmem:[#allocation5 + $0x10] sm:$0xff]
    %v52 = vld [vmem:[#allocation5 + $0x18] sm:$0xff]
    %v53 = vld [vmem:[%s2] sm:$0x1]
    %v55 = vlaneseq
    %v56 = vshrl.u32 %v55, 7
    %v57 = vsub.s32 0, %v56
    %v58 = vrot.slane %v53, %v57
    %vm60 = vcmask 261120
    %v62 = vsel %vm60, %v45, 0
    %v65 = vsel %vm60, %v46, 0
    %v68 = vsel %vm60, %v47, 0
    %v71 = vsel %vm60, %v48, 0
    %73 = vmatprep.subr.mxu0 0.0
    %74 = vmatpush1.msra.mxu0 %v49
    %75 = vmatprep.subr.mxu0 0.0
    %76 = vmatpush1.msra.mxu0 %v50
    %77 = vmatprep.subr.mxu0 0.0
    %78 = vmatpush1.msra.mxu0 %v51
    %79 = vmatprep.subr.mxu0 0.0
    %80 = vmatpush1.msra.mxu0 %v52
    %81 = vmatprep.subr.mxu0 0.0
    %82 = vmatpush1.msra.mxu0 0.0
    %83 = vmatprep.subr.mxu0 0.0
    %84 = vmatpush1.msra.mxu0 0.0
    %85 = vmatprep.subr.mxu0 0.0
    %86 = vmatpush1.msra.mxu0 0.0
    %87 = vmatprep.subr.mxu0 0.0
    %88 = vmatpush1.msra.mxu0 0.0
    %89 = vmatprep.subr.mxu0 0.0
    %90 = vmatpush1.msra.mxu0 0.0
    %91 = vmatprep.subr.mxu0 0.0
    %92 = vmatpush1.msra.mxu0 0.0
    %93 = vmatprep.subr.mxu0 0.0
    %94 = vmatpush1.msra.mxu0 0.0
    %95 = vmatprep.subr.mxu0 0.0
    %96 = vmatpush1.msra.mxu0 0.0
    %97 = vmatprep.subr.mxu0 0.0
    %98 = vmatpush1.msra.mxu0 0.0
    %99 = vmatprep.subr.mxu0 0.0
    %100 = vmatpush1.msra.mxu0 0.0
    %101 = vmatprep.subr.mxu0 0.0
    %102 = vmatpush1.msra.mxu0 0.0
    %103 = vmatprep.subr.mxu0 0.0
    %104 = vmatpush1.msra.mxu0 0.0
    %105 = vmatprep.subr.mxu0 0.0
    %106 = vmatpush1.msra.mxu0 0.0
    %107 = vmatprep.subr.mxu0 0.0
    %108 = vmatpush1.msra.mxu0 0.0
    %109 = vmatprep.subr.mxu0 0.0
    %110 = vmatpush1.msra.mxu0 0.0
    %111 = vmatprep.subr.mxu0 0.0
    %112 = vmatpush1.msra.mxu0 0.0
    %113 = vmatprep.subr.mxu0 0.0
    %114 = vmatpush1.msra.mxu0 0.0
    %115 = vmatprep.subr.mxu0 0.0
    %116 = vmatpush1.msra.mxu0 0.0
    %117 = vmatprep.subr.mxu0 0.0
    %118 = vmatpush1.msra.mxu0 0.0
    %119 = vmatprep.subr.mxu0 0.0
    %120 = vmatpush1.msra.mxu0 0.0
    %121 = vmatprep.subr.mxu0 0.0
    %122 = vmatpush1.msra.mxu0 0.0
    %123 = vmatprep.subr.mxu0 0.0
    %124 = vmatpush1.msra.mxu0 0.0
    %125 = vmatprep.subr.mxu0 0.0
    %126 = vmatpush1.msra.mxu0 0.0
    %127 = vmatprep.subr.mxu0 0.0
    %128 = vmatpush1.msra.mxu0 0.0
    %129 = vmatprep.subr.mxu0 0.0
    %130 = vmatpush1.msra.mxu0 0.0
    %131 = vmatprep.subr.mxu0 0.0
    %132 = vmatpush1.msra.mxu0 0.0
    %133 = vmatprep.subr.mxu0 0.0
    %134 = vmatpush1.msra.mxu0 0.0
    %135 = vmatprep.subr.mxu0 0.0
    %136 = vmatpush1.msra.mxu0 0.0
    %137 = vmatprep.mubr.f32.mxu0 0.0
    %138 = vmatmul.mubr.f32.gmra.mrb[0].mxu0 %v62
    %v139 = vpop.f32.mrb[0].mxu0
    %v140 = vadd.f32 %v58, %v139
    %v141 = vpop.f32.mrb[0].mxu0
    %142 = vmatprep.mubr.f32.mxu0 0.0
    %143 = vmatmul.mubr.f32.gmra.mrb[0].mxu0 %v65
    %v144 = vpop.f32.mrb[0].mxu0
    %v145 = vadd.f32 %v58, %v144
    %v146 = vpop.f32.mrb[0].mxu0
    %147 = vmatprep.mubr.f32.mxu0 0.0
    %148 = vmatmul.mubr.f32.gmra.mrb[0].mxu0 %v68
    %v149 = vpop.f32.mrb[0].mxu0
    %v150 = vadd.f32 %v58, %v149
    %v151 = vpop.f32.mrb[0].mxu0
    %152 = vmatprep.mubr.f32.mxu0 0.0
    %153 = vmatmul.mubr.f32.gmra.mrb[0].mxu0 %v71
    %v154 = vpop.f32.mrb[0].mxu0
    %v155 = vadd.f32 %v58, %v154
    %v156 = vpop.f32.mrb[0].mxu0
    %157 = vdwg.mxu0
    %v158 = vxor.u32 %v140, 2147483648
    %v159 = vxor.u32 %v145, 2147483648
    %v160 = vxor.u32 %v150, 2147483648
    %v161 = vxor.u32 %v155, 2147483648
    %v162 = vmul.f32 %v158, 1.442695
    %v163 = vpow.pop %v162
    %v164 = vmul.f32 %v159, 1.442695
    %v165 = vpow.pop %v164
    %v166 = vmul.f32 %v160, 1.442695
    %v167 = vpow.pop %v166
    %v168 = vmul.f32 %v161, 1.442695
    %v169 = vpow.pop %v168
    %v170 = vadd.f32 %v163, 1.0
    %v171 = vadd.f32 %v165, 1.0
    %v172 = vadd.f32 %v167, 1.0
    %v173 = vadd.f32 %v169, 1.0
    %v174 = vrcp.pop %v170
    %v175 = vmul.f32 1.0, %v174
    %v176 = vrcp.pop %v171
    %v177 = vmul.f32 1.0, %v176
    %v178 = vrcp.pop %v172
    %v179 = vmul.f32 1.0, %v178
    %v180 = vrcp.pop %v173
    %v181 = vmul.f32 1.0, %v180
    %186 = vrot.lane.b32.xlu0 %v140, 32
    %v187 = vpop.permute.xlu0 %186
    %188 = vrot.lane.b32.xlu0 %v145, 32
    %v189 = vpop.permute.xlu0 %188
    %190 = vrot.lane.b32.xlu0 %v150, 32
    %v191 = vpop.permute.xlu0 %190
    %192 = vrot.lane.b32.xlu0 %v155, 32
    %v193 = vpop.permute.xlu0 %192
    %v198 = vmul.f32 %v175, %v187
    %v199 = vmul.f32 %v177, %v189
    %v200 = vmul.f32 %v179, %v191
    %v201 = vmul.f32 %v181, %v193
    %206 = vrot.lane.b32.xlu0 %v198, 64
    %v207 = vpop.permute.xlu0 %206
    %208 = vrot.lane.b32.xlu0 %v199, 64
    %v209 = vpop.permute.xlu0 %208
    %210 = vrot.lane.b32.xlu0 %v200, 64
    %v211 = vpop.permute.xlu0 %210
    %212 = vrot.lane.b32.xlu0 %v201, 64
    %v213 = vpop.permute.xlu0 %212
    %v218 = vadd.f32 %v140, %v207
    %v219 = vadd.f32 %v145, %v209
    %v220 = vadd.f32 %v150, %v211
    %v221 = vadd.f32 %v155, %v213
    %v222 = vtanh.pop %v218
    %v223 = vtanh.pop %v219
    %v224 = vtanh.pop %v220
    %v225 = vtanh.pop %v221
    %v226 = vsub.f32 1.0, %v175
    %v227 = vsub.f32 1.0, %v177
    %v228 = vsub.f32 1.0, %v179
    %v229 = vsub.f32 1.0, %v181
    %234 = vrot.lane.b32.xlu0 %v222, 96
    %v235 = vpop.permute.xlu0 %234
    %236 = vrot.lane.b32.xlu0 %v223, 96
    %v237 = vpop.permute.xlu0 %236
    %238 = vrot.lane.b32.xlu0 %v224, 96
    %v239 = vpop.permute.xlu0 %238
    %240 = vrot.lane.b32.xlu0 %v225, 96
    %v241 = vpop.permute.xlu0 %240
    %v246 = vmul.f32 %v226, %v235
    %v247 = vmul.f32 %v227, %v237
    %v248 = vmul.f32 %v228, %v239
    %v249 = vmul.f32 %v229, %v241
    %250 = vrot.lane.b32.xlu0 %v45, 32
    %v251 = vpop.permute.xlu0 %250
    %252 = vrot.lane.b32.xlu0 %v46, 32
    %v253 = vpop.permute.xlu0 %252
    %254 = vrot.lane.b32.xlu0 %v47, 32
    %v255 = vpop.permute.xlu0 %254
    %256 = vrot.lane.b32.xlu0 %v48, 32
    %v257 = vpop.permute.xlu0 %256
    %v262 = vmul.f32 %v175, %v251
    %v263 = vmul.f32 %v177, %v253
    %v264 = vmul.f32 %v179, %v255
    %v265 = vmul.f32 %v181, %v257
    %v266 = vadd.f32 %v246, %v262
    %v267 = vadd.f32 %v247, %v263
    %v268 = vadd.f32 %v248, %v264
    %v269 = vadd.f32 %v249, %v265
    %274 = vrot.lane.b32.xlu0 %v266, 96
    %v275 = vpop.permute.xlu0 %274
    %276 = vrot.lane.b32.xlu0 %v267, 96
    %v277 = vpop.permute.xlu0 %276
    %278 = vrot.lane.b32.xlu0 %v268, 96
    %v279 = vpop.permute.xlu0 %278
    %280 = vrot.lane.b32.xlu0 %v269, 96
    %v281 = vpop.permute.xlu0 %280
    %286 = vst.msk [vmem:[#allocation7] sm:$0xff] %vm60, %v275
    %287 = vst.msk [vmem:[#allocation7 + $0x8] sm:$0xff] %vm60, %v277
    %288 = vst.msk [vmem:[#allocation7 + $0x10] sm:$0xff] %vm60, %v279
    %289 = vst.msk [vmem:[#allocation7 + $0x18] sm:$0xff] %vm60, %v281
    %v290 = vsel %vm60, %v275, 0.0
    %v291 = vsel %vm60, %v277, 0.0
    %v292 = vsel %vm60, %v279, 0.0
    %v293 = vsel %vm60, %v281, 0.0
    %v294 = vpack.c.bf16 %v291, %v290
    %v295 = vpack.c.bf16 %v293, %v292
    %v296 = vpack.c.bf16 0.0, 0.0
    %v300 = vunpack.c.l.b16 %v294
    %v301 = vunpack.c.h.b16 %v294
    %v302 = vunpack.c.l.b16 %v295
    %v303 = vunpack.c.h.b16 %v295
    %v304 = vunpack.c.l.b16 %v296
    %v305 = vunpack.c.h.b16 %v296
    %v306 = vpack.c.b16 %v300, %v300
    %v307 = vpack.c.b16 %v301, %v301
    %v308 = vpack.c.b16 %v302, %v302
    %v309 = vpack.c.b16 %v303, %v303
    %v310 = vpack.c.b16 %v304, %v304
    %v311 = vpack.c.b16 %v305, %v305
    %318 = vst [vmem:[%s4] sm:$0xf] %v306
    %319 = vst [vmem:[%s4 + $0x4] sm:$0xf] %v307
    %320 = vst [vmem:[%s4 + $0x8] sm:$0xf] %v308
    %321 = vst [vmem:[%s4 + $0xc] sm:$0xf] %v309
    %322 = vst [vmem:[%s4 + $0x10] sm:$0xf] %v310
    %323 = vst [vmem:[%s4 + $0x14] sm:$0xf] %v311
    %324 = vst [vmem:[%s4 + $0x18] sm:$0xf] %v310
    %325 = vst [vmem:[%s4 + $0x1c] sm:$0xf] %v311
    %326 = vst [vmem:[%s4 + $0x20] sm:$0xf] %v310
    %327 = vst [vmem:[%s4 + $0x24] sm:$0xf] %v311
    %328 = vst [vmem:[%s4 + $0x28] sm:$0xf] %v310
    %329 = vst [vmem:[%s4 + $0x2c] sm:$0xf] %v311
    %330 = vst [vmem:[%s4 + $0x30] sm:$0xf] %v310
    %331 = vst [vmem:[%s4 + $0x34] sm:$0xf] %v311
    %332 = vst [vmem:[%s4 + $0x38] sm:$0xf] %v310
    %333 = vst [vmem:[%s4 + $0x3c] sm:$0xf] %v311
    // Predicated region
    $region22: #{_evolve_gcno_forward.2} parent=1 // pred_check
      _
    $region23: #{_evolve_gcno_forward.2} parent=1 // pred_check_branch
      %335 = sbr.rel (0) target = $region25
    $region24: #{_evolve_gcno_forward.2} parent=1 // pred_region
      %s337 = ssub.s32 512, 512
      %338 = vsyncadd [#allocation4], %s337
      %s339 = sshll.u32 [#allocation7], 4
      %s340 = int_to_ptr.vmem [resolvable:$true] %s339
      %345 = dma.vmem_to_hbm [thread:$0]  %s340, 512, %s3, [#allocation4], 128, 128, 8
    $region25: #{_evolve_gcno_forward.2} parent=1 // pred_fallthru
      _
    // Predicated region
    $region26: #{_evolve_gcno_forward.2} parent=1 // pred_check
      _
    $region27: #{_evolve_gcno_forward.2} parent=1 // pred_check_branch
      %347 = sbr.rel (0) target = $region29
    $region28: #{_evolve_gcno_forward.2} parent=1 // pred_region
      _
    $region29: #{_evolve_gcno_forward.2} parent=1 // pred_fallthru
      _
    // Predicated region
    $region30: #{_evolve_gcno_forward.2} parent=1 // pred_check
      _
    $region31: #{_evolve_gcno_forward.2} parent=1 // pred_check_branch
      %349 = sbr.rel (0) target = $region33
    $region32: #{_evolve_gcno_forward.2} parent=1 // pred_region
      %350 = dma.done [#allocation4], 512
    $region33: #{_evolve_gcno_forward.2} parent=1 // pred_fallthru
      _
    // Predicated region
    $region34: #{_evolve_gcno_forward.2} parent=1 // pred_check
      _
    $region35: #{_evolve_gcno_forward.2} parent=1 // pred_check_branch
      %352 = sbr.rel (0) target = $region37
    $region36: #{_evolve_gcno_forward.2} parent=1 // pred_region
      _
    $region37: #{_evolve_gcno_forward.2} parent=1 // pred_fallthru
      _
    %353 = vsyncpa [#allocation3], 1
    %354 = vsyncpa [#allocation6], 1
    %355 = vsyncpa [#allocation4], 1

// kernel: _evolve_gcno_forward.3
$region0: #{_evolve_gcno_forward.3}
  #allocation0 [shape = 'u32[]', space=smem, size = 0x4, offset = 0x4, fixed_abs, tag = 'smem constant byte address 0x4 - core index']
  #allocation1 [shape = 'u32[144,128]{1,0:T(1,128)}', space=vmem, size = 0x12000, scoped, tag = 'internal scratch']
  #allocation2 [shape = 'f32[128,128]{1,0:T(8,128)}', space=vmem, size = 0x10000, scoped, tag = 'scratch operand']
  %s0 = inlined_call_operand.vmem [shape: bf16[128,128], index: 0, kind: input, shape index: {}]
  %s1 = inlined_call_operand.vmem [shape: bf16[128,128], index: 1, kind: input, shape index: {}]
  %s2 = inlined_call_operand.hbm [shape: bf16[128,128], index: 2, kind: input, shape index: {}]
  %s3 = inlined_call_operand.vmem [shape: f32[128,128], index: 3, kind: output, shape index: {}]
  %s4 = sld [smem:[#allocation0]]
  $region34: #{_evolve_gcno_forward.3} parent=0
    _
  %s6 = ssub.s32 1, %s4
  %s7 = scalar_select 0, %s6, %s4
  $region1: #{_evolve_gcno_forward.3} parent=0
    #allocation3 [shape = 'u8[32768]{0}', space=vmem, size = 0x8000, scoped, tag = 'input window, operand 2, single buffered']
    #allocation4 [shape = 's32[1]{0}', space=sflag, size = 0x4, scoped, tag = 'scoped memory for _evolve_gcno_forward.3']
    %8 = vsyncpa [#allocation4], 0
    // Predicated region
    $region2: #{_evolve_gcno_forward.3} parent=1 // pred_check
      _
    $region3: #{_evolve_gcno_forward.3} parent=1 // pred_check_branch
      %10 = sbr.rel (0) target = $region5
    $region4: #{_evolve_gcno_forward.3} parent=1 // pred_region
      _
    $region5: #{_evolve_gcno_forward.3} parent=1 // pred_fallthru
      _
    // Predicated region
    $region6: #{_evolve_gcno_forward.3} parent=1 // pred_check
      _
    $region7: #{_evolve_gcno_forward.3} parent=1 // pred_check_branch
      %12 = sbr.rel (0) target = $region9
    $region8: #{_evolve_gcno_forward.3} parent=1 // pred_region
      _
    $region9: #{_evolve_gcno_forward.3} parent=1 // pred_fallthru
      _
    // Predicated region
    $region10: #{_evolve_gcno_forward.3} parent=1 // pred_check
      _
    $region11: #{_evolve_gcno_forward.3} parent=1 // pred_check_branch
      %14 = sbr.rel (0) target = $region13
    $region12: #{_evolve_gcno_forward.3} parent=1 // pred_region
      %s16 = ssub.s32 1024, 1024
      %17 = vsyncadd [#allocation4], %s16
      %s18 = sshll.u32 [#allocation3], 4
      %s19 = int_to_ptr.vmem [resolvable:$true] %s18
      %24 = dma.hbm_to_vmem [thread:$0]  %s2, 1024, %s19, [#allocation4], 64, 64, 4
    $region13: #{_evolve_gcno_forward.3} parent=1 // pred_fallthru
      _
    // Predicated region
    $region14: #{_evolve_gcno_forward.3} parent=1 // pred_check
      _
    $region15: #{_evolve_gcno_forward.3} parent=1 // pred_check_branch
      %26 = sbr.rel (0) target = $region17
    $region16: #{_evolve_gcno_forward.3} parent=1 // pred_region
      %27 = dma.done [#allocation4], 1024
    $region17: #{_evolve_gcno_forward.3} parent=1 // pred_fallthru
      _
    %p29 = scmp.eq.s32.totalorder 0, 0
    // Predicated region
    $region18: #{_evolve_gcno_forward.3} parent=1 // pred_check
      %p30 = pneg %p29
    $region19: #{_evolve_gcno_forward.3} parent=1 // pred_check_branch
      %32 = sbr.rel (%p30) target = $region21
    $region20: #{_evolve_gcno_forward.3} parent=1 // pred_region
      %33 = vst [vmem:[#allocation2] sm:$0xff] 0.0
      %34 = vst [vmem:[#allocation2 + $0x8] sm:$0xff] 0.0
      %35 = vst [vmem:[#allocation2 + $0x10] sm:$0xff] 0.0
      %36 = vst [vmem:[#allocation2 + $0x18] sm:$0xff] 0.0
      %37 = vst [vmem:[#allocation2 + $0x20] sm:$0xff] 0.0
      %38 = vst [vmem:[#allocation2 + $0x28] sm:$0xff] 0.0
      %39 = vst [vmem:[#allocation2 + $0x30] sm:$0xff] 0.0
      %40 = vst [vmem:[#allocation2 + $0x38] sm:$0xff] 0.0
      %41 = vst [vmem:[#allocation2 + $0x40] sm:$0xff] 0.0
      %42 = vst [vmem:[#allocation2 + $0x48] sm:$0xff] 0.0
      %43 = vst [vmem:[#allocation2 + $0x50] sm:$0xff] 0.0
      %44 = vst [vmem:[#allocation2 + $0x58] sm:$0xff] 0.0
      %45 = vst [vmem:[#allocation2 + $0x60] sm:$0xff] 0.0
      %46 = vst [vmem:[#allocation2 + $0x68] sm:$0xff] 0.0
      %47 = vst [vmem:[#allocation2 + $0x70] sm:$0xff] 0.0
      %48 = vst [vmem:[#allocation2 + $0x78] sm:$0xff] 0.0
    $region21: #{_evolve_gcno_forward.3} parent=1 // pred_fallthru
      _
    %v49 = vld [vmem:[#allocation3] sm:$0xf]
    %v50 = vld [vmem:[#allocation3 + $0x4] sm:$0xf]
    %v51 = vld [vmem:[#allocation3 + $0x8] sm:$0xf]
    %v52 = vld [vmem:[#allocation3 + $0xc] sm:$0xf]
    %v53 = vld [vmem:[#allocation3 + $0x10] sm:$0xf]
    %v54 = vld [vmem:[#allocation3 + $0x14] sm:$0xf]
    %v55 = vld [vmem:[#allocation3 + $0x18] sm:$0xf]
    %v56 = vld [vmem:[#allocation3 + $0x1c] sm:$0xf]
    %v57 = vld [vmem:[#allocation3 + $0x20] sm:$0xf]
    %v58 = vld [vmem:[#allocation3 + $0x24] sm:$0xf]
    %v59 = vld [vmem:[#allocation3 + $0x28] sm:$0xf]
    %v60 = vld [vmem:[#allocation3 + $0x2c] sm:$0xf]
    %v61 = vld [vmem:[#allocation3 + $0x30] sm:$0xf]
    %v62 = vld [vmem:[#allocation3 + $0x34] sm:$0xf]
    %v63 = vld [vmem:[#allocation3 + $0x38] sm:$0xf]
    %v64 = vld [vmem:[#allocation3 + $0x3c] sm:$0xf]
    %s65 = smul.u32 0, 128
    %s66 = sshra.s32 %s65, 3
    %s67 = sand.u32 %s65, 7
    %s68 = smul.addr %s66, 4
    %s69 = scalar_lea.vmem %s1, %s68
    %v70 = vld [vmem:[%s69] sm:$0xf]
    %v71 = vld [vmem:[%s69 + $0x4] sm:$0xf]
    %v72 = vld [vmem:[%s69 + $0x8] sm:$0xf]
    %v73 = vld [vmem:[%s69 + $0xc] sm:$0xf]
    %v74 = vld [vmem:[%s69 + $0x10] sm:$0xf]
    %v75 = vld [vmem:[%s69 + $0x14] sm:$0xf]
    %v76 = vld [vmem:[%s69 + $0x18] sm:$0xf]
    %v77 = vld [vmem:[%s69 + $0x1c] sm:$0xf]
    %v78 = vld [vmem:[%s69 + $0x20] sm:$0xf]
    %v79 = vld [vmem:[%s69 + $0x24] sm:$0xf]
    %v80 = vld [vmem:[%s69 + $0x28] sm:$0xf]
    %v81 = vld [vmem:[%s69 + $0x2c] sm:$0xf]
    %v82 = vld [vmem:[%s69 + $0x30] sm:$0xf]
    %v83 = vld [vmem:[%s69 + $0x34] sm:$0xf]
    %v84 = vld [vmem:[%s69 + $0x38] sm:$0xf]
    %v85 = vld [vmem:[%s69 + $0x3c] sm:$0xf]
    %v86 = vld [vmem:[#allocation2] sm:$0xff]
    %v87 = vld [vmem:[#allocation2 + $0x8] sm:$0xff]
    %v88 = vld [vmem:[#allocation2 + $0x10] sm:$0xff]
    %v89 = vld [vmem:[#allocation2 + $0x18] sm:$0xff]
    %v90 = vld [vmem:[#allocation2 + $0x20] sm:$0xff]
    %v91 = vld [vmem:[#allocation2 + $0x28] sm:$0xff]
    %v92 = vld [vmem:[#allocation2 + $0x30] sm:$0xff]
    %v93 = vld [vmem:[#allocation2 + $0x38] sm:$0xff]
    %v94 = vld [vmem:[#allocation2 + $0x40] sm:$0xff]
    %v95 = vld [vmem:[#allocation2 + $0x48] sm:$0xff]
    %v96 = vld [vmem:[#allocation2 + $0x50] sm:$0xff]
    %v97 = vld [vmem:[#allocation2 + $0x58] sm:$0xff]
    %v98 = vld [vmem:[#allocation2 + $0x60] sm:$0xff]
    %v99 = vld [vmem:[#allocation2 + $0x68] sm:$0xff]
    %v100 = vld [vmem:[#allocation2 + $0x70] sm:$0xff]
    %v101 = vld [vmem:[#allocation2 + $0x78] sm:$0xff]
    %v118 = vunpack.c.l.b16 %v49
    %v119 = vunpack.c.l.b16 %v50
    %v120 = vunpack.c.l.b16 %v51
    %v121 = vunpack.c.l.b16 %v52
    %v122 = vunpack.c.l.b16 %v53
    %v123 = vunpack.c.l.b16 %v54
    %v124 = vunpack.c.l.b16 %v55
    %v125 = vunpack.c.l.b16 %v56
    %v126 = vunpack.c.l.b16 %v57
    %v127 = vunpack.c.l.b16 %v58
    %v128 = vunpack.c.l.b16 %v59
    %v129 = vunpack.c.l.b16 %v60
    %v130 = vunpack.c.l.b16 %v61
    %v131 = vunpack.c.l.b16 %v62
    %v132 = vunpack.c.l.b16 %v63
    %v133 = vunpack.c.l.b16 %v64
    %v134 = vpack.c.b16 %v119, %v118
    %v135 = vpack.c.b16 %v121, %v120
    %v136 = vpack.c.b16 %v123, %v122
    %v137 = vpack.c.b16 %v125, %v124
    %v138 = vpack.c.b16 %v127, %v126
    %v139 = vpack.c.b16 %v129, %v128
    %v140 = vpack.c.b16 %v131, %v130
    %v141 = vpack.c.b16 %v133, %v132
    %v166 = vunpack.c.l.b16 %v70
    %v167 = vunpack.c.l.b16 %v71
    %v168 = vunpack.c.l.b16 %v72
    %v169 = vunpack.c.l.b16 %v73
    %v170 = vunpack.c.l.b16 %v74
    %v171 = vunpack.c.l.b16 %v75
    %v172 = vunpack.c.l.b16 %v76
    %v173 = vunpack.c.l.b16 %v77
    %v174 = vunpack.c.l.b16 %v78
    %v175 = vunpack.c.l.b16 %v79
    %v176 = vunpack.c.l.b16 %v80
    %v177 = vunpack.c.l.b16 %v81
    %v178 = vunpack.c.l.b16 %v82
    %v179 = vunpack.c.l.b16 %v83
    %v180 = vunpack.c.l.b16 %v84
    %v181 = vunpack.c.l.b16 %v85
    %v182 = vpack.c.b16 %v167, %v166
    %v183 = vpack.c.b16 %v169, %v168
    %v184 = vpack.c.b16 %v171, %v170
    %v185 = vpack.c.b16 %v173, %v172
    %v186 = vpack.c.b16 %v175, %v174
    %v187 = vpack.c.b16 %v177, %v176
    %v188 = vpack.c.b16 %v179, %v178
    %v189 = vpack.c.b16 %v181, %v180
    %198 = vmatprep.subr.bf16.mxu0 0
    %199 = vmatpush1.bf16.msra.mxu0 %v182
    %200 = vmatprep.subr.bf16.mxu0 0
    %201 = vmatpush1.bf16.msra.mxu0 %v183
    %202 = vmatprep.subr.bf16.mxu0 0
    %203 = vmatpush1.bf16.msra.mxu0 %v184
    %204 = vmatprep.subr.bf16.mxu0 0
    %205 = vmatpush1.bf16.msra.mxu0 %v185
    %206 = vmatprep.subr.bf16.mxu0 0
    %207 = vmatpush1.bf16.msra.mxu0 %v186
    %208 = vmatprep.subr.bf16.mxu0 0
    %209 = vmatpush1.bf16.msra.mxu0 %v187
    %210 = vmatprep.subr.bf16.mxu0 0
    %211 = vmatpush1.bf16.msra.mxu0 %v188
    %212 = vmatprep.subr.bf16.mxu0 0
    %213 = vmatpush1.bf16.msra.mxu0 %v189
    %214 = vmatprep.subr.bf16.mxu0 0
    %215 = vmatpush1.bf16.msra.mxu0 0
    %216 = vmatprep.subr.bf16.mxu0 0
    %217 = vmatpush1.bf16.msra.mxu0 0
    %218 = vmatprep.subr.bf16.mxu0 0
    %219 = vmatpush1.bf16.msra.mxu0 0
    %220 = vmatprep.subr.bf16.mxu0 0
    %221 = vmatpush1.bf16.msra.mxu0 0
    %222 = vmatprep.subr.bf16.mxu0 0
    %223 = vmatpush1.bf16.msra.mxu0 0
    %224 = vmatprep.subr.bf16.mxu0 0
    %225 = vmatpush1.bf16.msra.mxu0 0
    %226 = vmatprep.subr.bf16.mxu0 0
    %227 = vmatpush1.bf16.msra.mxu0 0
    %228 = vmatprep.subr.bf16.mxu0 0
    %229 = vmatpush1.bf16.msra.mxu0 0
    %230 = vmatprep.mubr.bf16.mxu0 0
    %231 = vmatmul.mubr.bf16.gmra.mrb[0].mxu0 %v134
    %v232 = vpop.f32.mrb[0].mxu0
    %v233 = vadd.f32 0.0, %v232
    %v234 = vpop.f32.mrb[0].mxu0
    %v235 = vpop.f32.mrb[0].mxu0
    %v236 = vadd.f32 0.0, %v235
    %v237 = vpop.f32.mrb[0].mxu0
    %238 = vmatprep.mubr.bf16.mxu0 0
    %239 = vmatmul.mubr.bf16.gmra.mrb[0].mxu0 %v135
    %v240 = vpop.f32.mrb[0].mxu0
    %v241 = vadd.f32 0.0, %v240
    %v242 = vpop.f32.mrb[0].mxu0
    %v243 = vpop.f32.mrb[0].mxu0
    %v244 = vadd.f32 0.0, %v243
    %v245 = vpop.f32.mrb[0].mxu0
    %246 = vmatprep.mubr.bf16.mxu0 0
    %247 = vmatmul.mubr.bf16.gmra.mrb[0].mxu0 %v136
    %v248 = vpop.f32.mrb[0].mxu0
    %v249 = vadd.f32 0.0, %v248
    %v250 = vpop.f32.mrb[0].mxu0
    %v251 = vpop.f32.mrb[0].mxu0
    %v252 = vadd.f32 0.0, %v251
    %v253 = vpop.f32.mrb[0].mxu0
    %254 = vmatprep.mubr.bf16.mxu0 0
    %255 = vmatmul.mubr.bf16.gmra.mrb[0].mxu0 %v137
    %v256 = vpop.f32.mrb[0].mxu0
    %v257 = vadd.f32 0.0, %v256
    %v258 = vpop.f32.mrb[0].mxu0
    %v259 = vpop.f32.mrb[0].mxu0
    %v260 = vadd.f32 0.0, %v259
    %v261 = vpop.f32.mrb[0].mxu0
    %262 = vmatprep.mubr.bf16.mxu0 0
    %263 = vmatmul.mubr.bf16.gmra.mrb[0].mxu0 %v138
    %v264 = vpop.f32.mrb[0].mxu0
    %v265 = vadd.f32 0.0, %v264
    %v266 = vpop.f32.mrb[0].mxu0
    %v267 = vpop.f32.mrb[0].mxu0
    %v268 = vadd.f32 0.0, %v267
    %v269 = vpop.f32.mrb[0].mxu0
    %270 = vmatprep.mubr.bf16.mxu0 0
    %271 = vmatmul.mubr.bf16.gmra.mrb[0].mxu0 %v139
    %v272 = vpop.f32.mrb[0].mxu0
    %v273 = vadd.f32 0.0, %v272
    %v274 = vpop.f32.mrb[0].mxu0
    %v275 = vpop.f32.mrb[0].mxu0
    %v276 = vadd.f32 0.0, %v275
    %v277 = vpop.f32.mrb[0].mxu0
    %278 = vmatprep.mubr.bf16.mxu0 0
    %279 = vmatmul.mubr.bf16.gmra.mrb[0].mxu0 %v140
    %v280 = vpop.f32.mrb[0].mxu0
    %v281 = vadd.f32 0.0, %v280
    %v282 = vpop.f32.mrb[0].mxu0
    %v283 = vpop.f32.mrb[0].mxu0
    %v284 = vadd.f32 0.0, %v283
    %v285 = vpop.f32.mrb[0].mxu0
    %286 = vmatprep.mubr.bf16.mxu0 0
    %287 = vmatmul.mubr.bf16.gmra.mrb[0].mxu0 %v141
    %v288 = vpop.f32.mrb[0].mxu0
    %v289 = vadd.f32 0.0, %v288
    %v290 = vpop.f32.mrb[0].mxu0
    %v291 = vpop.f32.mrb[0].mxu0
    %v292 = vadd.f32 0.0, %v291
    %v293 = vpop.f32.mrb[0].mxu0
    %294 = vdwg.mxu0
    %v295 = vadd.f32 %v86, %v233
    %v296 = vadd.f32 %v87, %v236
    %v297 = vadd.f32 %v88, %v241
    %v298 = vadd.f32 %v89, %v244
    %v299 = vadd.f32 %v90, %v249
    %v300 = vadd.f32 %v91, %v252
    %v301 = vadd.f32 %v92, %v257
    %v302 = vadd.f32 %v93, %v260
    %v303 = vadd.f32 %v94, %v265
    %v304 = vadd.f32 %v95, %v268
    %v305 = vadd.f32 %v96, %v273
    %v306 = vadd.f32 %v97, %v276
    %v307 = vadd.f32 %v98, %v281
    %v308 = vadd.f32 %v99, %v284
    %v309 = vadd.f32 %v100, %v289
    %v310 = vadd.f32 %v101, %v292
    %311 = vst [vmem:[#allocation2] sm:$0xff] %v295
    %312 = vst [vmem:[#allocation2 + $0x8] sm:$0xff] %v296
    %313 = vst [vmem:[#allocation2 + $0x10] sm:$0xff] %v297
    %314 = vst [vmem:[#allocation2 + $0x18] sm:$0xff] %v298
    %315 = vst [vmem:[#allocation2 + $0x20] sm:$0xff] %v299
    %316 = vst [vmem:[#allocation2 + $0x28] sm:$0xff] %v300
    %317 = vst [vmem:[#allocation2 + $0x30] sm:$0xff] %v301
    %318 = vst [vmem:[#allocation2 + $0x38] sm:$0xff] %v302
    %319 = vst [vmem:[#allocation2 + $0x40] sm:$0xff] %v303
    %320 = vst [vmem:[#allocation2 + $0x48] sm:$0xff] %v304
    %321 = vst [vmem:[#allocation2 + $0x50] sm:$0xff] %v305
    %322 = vst [vmem:[#allocation2 + $0x58] sm:$0xff] %v306
    %323 = vst [vmem:[#allocation2 + $0x60] sm:$0xff] %v307
    %324 = vst [vmem:[#allocation2 + $0x68] sm:$0xff] %v308
    %325 = vst [vmem:[#allocation2 + $0x70] sm:$0xff] %v309
    %326 = vst [vmem:[#allocation2 + $0x78] sm:$0xff] %v310
    // Predicated region
    $region22: #{_evolve_gcno_forward.3} parent=1 // pred_check
      %p327 = pneg %p29
    $region23: #{_evolve_gcno_forward.3} parent=1 // pred_check_branch
      %329 = sbr.rel (%p327) target = $region25
    $region24: #{_evolve_gcno_forward.3} parent=1 // pred_region
      %v330 = vld [vmem:[#allocation2] sm:$0xff]
      %v331 = vld [vmem:[#allocation2 + $0x8] sm:$0xff]
      %v332 = vld [vmem:[#allocation2 + $0x10] sm:$0xff]
      %v333 = vld [vmem:[#allocation2 + $0x18] sm:$0xff]
      %v334 = vld [vmem:[#allocation2 + $0x20] sm:$0xff]
      %v335 = vld [vmem:[#allocation2 + $0x28] sm:$0xff]
      %v336 = vld [vmem:[#allocation2 + $0x30] sm:$0xff]
      %v337 = vld [vmem:[#allocation2 + $0x38] sm:$0xff]
      %v338 = vld [vmem:[#allocation2 + $0x40] sm:$0xff]
      %v339 = vld [vmem:[#allocation2 + $0x48] sm:$0xff]
      %v340 = vld [vmem:[#allocation2 + $0x50] sm:$0xff]
      %v341 = vld [vmem:[#allocation2 + $0x58] sm:$0xff]
      %v342 = vld [vmem:[#allocation2 + $0x60] sm:$0xff]
      %v343 = vld [vmem:[#allocation2 + $0x68] sm:$0xff]
      %v344 = vld [vmem:[#allocation2 + $0x70] sm:$0xff]
      %v345 = vld [vmem:[#allocation2 + $0x78] sm:$0xff]
      %v346 = vpack.c.bf16 %v331, %v330
      %v347 = vpack.c.bf16 %v333, %v332
      %v348 = vpack.c.bf16 %v335, %v334
      %v349 = vpack.c.bf16 %v337, %v336
      %v350 = vpack.c.bf16 %v339, %v338
      %v351 = vpack.c.bf16 %v341, %v340
      %v352 = vpack.c.bf16 %v343, %v342
      %v353 = vpack.c.bf16 %v345, %v344
      %v354 = vld [vmem:[%s0] sm:$0xf]
      %v355 = vld [vmem:[%s0 + $0x4] sm:$0xf]
      %v356 = vld [vmem:[%s0 + $0x8] sm:$0xf]
      %v357 = vld [vmem:[%s0 + $0xc] sm:$0xf]
      %v358 = vld [vmem:[%s0 + $0x10] sm:$0xf]
      %v359 = vld [vmem:[%s0 + $0x14] sm:$0xf]
      %v360 = vld [vmem:[%s0 + $0x18] sm:$0xf]
      %v361 = vld [vmem:[%s0 + $0x1c] sm:$0xf]
      %v362 = vld [vmem:[%s0 + $0x20] sm:$0xf]
      %v363 = vld [vmem:[%s0 + $0x24] sm:$0xf]
      %v364 = vld [vmem:[%s0 + $0x28] sm:$0xf]
      %v365 = vld [vmem:[%s0 + $0x2c] sm:$0xf]
      %v366 = vld [vmem:[%s0 + $0x30] sm:$0xf]
      %v367 = vld [vmem:[%s0 + $0x34] sm:$0xf]
      %v368 = vld [vmem:[%s0 + $0x38] sm:$0xf]
      %v369 = vld [vmem:[%s0 + $0x3c] sm:$0xf]
      %v386 = vunpack.c.l.b16 %v354
      %v387 = vunpack.c.l.b16 %v355
      %v388 = vunpack.c.l.b16 %v356
      %v389 = vunpack.c.l.b16 %v357
      %v390 = vunpack.c.l.b16 %v358
      %v391 = vunpack.c.l.b16 %v359
      %v392 = vunpack.c.l.b16 %v360
      %v393 = vunpack.c.l.b16 %v361
      %v394 = vunpack.c.l.b16 %v362
      %v395 = vunpack.c.l.b16 %v363
      %v396 = vunpack.c.l.b16 %v364
      %v397 = vunpack.c.l.b16 %v365
      %v398 = vunpack.c.l.b16 %v366
      %v399 = vunpack.c.l.b16 %v367
      %v400 = vunpack.c.l.b16 %v368
      %v401 = vunpack.c.l.b16 %v369
      %v402 = vpack.c.b16 %v387, %v386
      %v403 = vpack.c.b16 %v389, %v388
      %v404 = vpack.c.b16 %v391, %v390
      %v405 = vpack.c.b16 %v393, %v392
      %v406 = vpack.c.b16 %v395, %v394
      %v407 = vpack.c.b16 %v397, %v396
      %v408 = vpack.c.b16 %v399, %v398
      %v409 = vpack.c.b16 %v401, %v400
      %418 = vmatprep.subr.bf16.mxu0 0
      %419 = vmatpush1.bf16.msra.mxu0 %v402
      %420 = vmatprep.subr.bf16.mxu0 0
      %421 = vmatpush1.bf16.msra.mxu0 %v403
      %422 = vmatprep.subr.bf16.mxu0 0
      %423 = vmatpush1.bf16.msra.mxu0 %v404
      %424 = vmatprep.subr.bf16.mxu0 0
      %425 = vmatpush1.bf16.msra.mxu0 %v405
      %426 = vmatprep.subr.bf16.mxu0 0
      %427 = vmatpush1.bf16.msra.mxu0 %v406
      %428 = vmatprep.subr.bf16.mxu0 0
      %429 = vmatpush1.bf16.msra.mxu0 %v407
      %430 = vmatprep.subr.bf16.mxu0 0
      %431 = vmatpush1.bf16.msra.mxu0 %v408
      %432 = vmatprep.subr.bf16.mxu0 0
      %433 = vmatpush1.bf16.msra.mxu0 %v409
      %434 = vmatprep.subr.bf16.mxu0 0
      %435 = vmatpush1.bf16.msra.mxu0 0
      %436 = vmatprep.subr.bf16.mxu0 0
      %437 = vmatpush1.bf16.msra.mxu0 0
      %438 = vmatprep.subr.bf16.mxu0 0
      %439 = vmatpush1.bf16.msra.mxu0 0
      %440 = vmatprep.subr.bf16.mxu0 0
      %441 = vmatpush1.bf16.msra.mxu0 0
      %442 = vmatprep.subr.bf16.mxu0 0
      %443 = vmatpush1.bf16.msra.mxu0 0
      %444 = vmatprep.subr.bf16.mxu0 0
      %445 = vmatpush1.bf16.msra.mxu0 0
      %446 = vmatprep.subr.bf16.mxu0 0
      %447 = vmatpush1.bf16.msra.mxu0 0
      %448 = vmatprep.subr.bf16.mxu0 0
      %449 = vmatpush1.bf16.msra.mxu0 0
      %450 = vmatprep.mubr.bf16.mxu0 0
      %451 = vmatmul.mubr.bf16.gmra.mrb[0].mxu0 %v346
      %v452 = vpop.f32.mrb[0].mxu0
      %v453 = vadd.f32 0.0, %v452
      %v454 = vpop.f32.mrb[0].mxu0
      %v455 = vpop.f32.mrb[0].mxu0
      %v456 = vadd.f32 0.0, %v455
      %v457 = vpop.f32.mrb[0].mxu0
      %458 = vmatprep.mubr.bf16.mxu0 0
      %459 = vmatmul.mubr.bf16.gmra.mrb[0].mxu0 %v347
      %v460 = vpop.f32.mrb[0].mxu0
      %v461 = vadd.f32 0.0, %v460
      %v462 = vpop.f32.mrb[0].mxu0
      %v463 = vpop.f32.mrb[0].mxu0
      %v464 = vadd.f32 0.0, %v463
      %v465 = vpop.f32.mrb[0].mxu0
      %466 = vmatprep.mubr.bf16.mxu0 0
      %467 = vmatmul.mubr.bf16.gmra.mrb[0].mxu0 %v348
      %v468 = vpop.f32.mrb[0].mxu0
      %v469 = vadd.f32 0.0, %v468
      %v470 = vpop.f32.mrb[0].mxu0
      %v471 = vpop.f32.mrb[0].mxu0
      %v472 = vadd.f32 0.0, %v471
      %v473 = vpop.f32.mrb[0].mxu0
      %474 = vmatprep.mubr.bf16.mxu0 0
      %475 = vmatmul.mubr.bf16.gmra.mrb[0].mxu0 %v349
      %v476 = vpop.f32.mrb[0].mxu0
      %v477 = vadd.f32 0.0, %v476
      %v478 = vpop.f32.mrb[0].mxu0
      %v479 = vpop.f32.mrb[0].mxu0
      %v480 = vadd.f32 0.0, %v479
      %v481 = vpop.f32.mrb[0].mxu0
      %482 = vmatprep.mubr.bf16.mxu0 0
      %483 = vmatmul.mubr.bf16.gmra.mrb[0].mxu0 %v350
      %v484 = vpop.f32.mrb[0].mxu0
      %v485 = vadd.f32 0.0, %v484
      %v486 = vpop.f32.mrb[0].mxu0
      %v487 = vpop.f32.mrb[0].mxu0
      %v488 = vadd.f32 0.0, %v487
      %v489 = vpop.f32.mrb[0].mxu0
      %490 = vmatprep.mubr.bf16.mxu0 0
      %491 = vmatmul.mubr.bf16.gmra.mrb[0].mxu0 %v351
      %v492 = vpop.f32.mrb[0].mxu0
      %v493 = vadd.f32 0.0, %v492
      %v494 = vpop.f32.mrb[0].mxu0
      %v495 = vpop.f32.mrb[0].mxu0
      %v496 = vadd.f32 0.0, %v495
      %v497 = vpop.f32.mrb[0].mxu0
      %498 = vmatprep.mubr.bf16.mxu0 0
      %499 = vmatmul.mubr.bf16.gmra.mrb[0].mxu0 %v352
      %v500 = vpop.f32.mrb[0].mxu0
      %v501 = vadd.f32 0.0, %v500
      %v502 = vpop.f32.mrb[0].mxu0
      %v503 = vpop.f32.mrb[0].mxu0
      %v504 = vadd.f32 0.0, %v503
      %v505 = vpop.f32.mrb[0].mxu0
      %506 = vmatprep.mubr.bf16.mxu0 0
      %507 = vmatmul.mubr.bf16.gmra.mrb[0].mxu0 %v353
      %v508 = vpop.f32.mrb[0].mxu0
      %v509 = vadd.f32 0.0, %v508
      %v510 = vpop.f32.mrb[0].mxu0
      %v511 = vpop.f32.mrb[0].mxu0
      %v512 = vadd.f32 0.0, %v511
      %v513 = vpop.f32.mrb[0].mxu0
      %514 = vdwg.mxu0
      %515 = vst [vmem:[%s3] sm:$0xff] %v453
      %516 = vst [vmem:[%s3 + $0x8] sm:$0xff] %v456
      %517 = vst [vmem:[%s3 + $0x10] sm:$0xff] %v461
      %518 = vst [vmem:[%s3 + $0x18] sm:$0xff] %v464
      %519 = vst [vmem:[%s3 + $0x20] sm:$0xff] %v469
      %520 = vst [vmem:[%s3 + $0x28] sm:$0xff] %v472
      %521 = vst [vmem:[%s3 + $0x30] sm:$0xff] %v477
      %522 = vst [vmem:[%s3 + $0x38] sm:$0xff] %v480
      %523 = vst [vmem:[%s3 + $0x40] sm:$0xff] %v485
      %524 = vst [vmem:[%s3 + $0x48] sm:$0xff] %v488
      %525 = vst [vmem:[%s3 + $0x50] sm:$0xff] %v493
      %526 = vst [vmem:[%s3 + $0x58] sm:$0xff] %v496
      %527 = vst [vmem:[%s3 + $0x60] sm:$0xff] %v501
      %528 = vst [vmem:[%s3 + $0x68] sm:$0xff] %v504
      %529 = vst [vmem:[%s3 + $0x70] sm:$0xff] %v509
      %530 = vst [vmem:[%s3 + $0x78] sm:$0xff] %v512
    $region25: #{_evolve_gcno_forward.3} parent=1 // pred_fallthru
      _
    // Predicated region
    $region26: #{_evolve_gcno_forward.3} parent=1 // pred_check
      _
    $region27: #{_evolve_gcno_forward.3} parent=1 // pred_check_branch
      %532 = sbr.rel (0) target = $region29
    $region28: #{_evolve_gcno_forward.3} parent=1 // pred_region
      _
    $region29: #{_evolve_gcno_forward.3} parent=1 // pred_fallthru
      _
    // Predicated region
    $region30: #{_evolve_gcno_forward.3} parent=1 // pred_check
      _
    $region31: #{_evolve_gcno_forward.3} parent=1 // pred_check_branch
      %534 = sbr.rel (0) target = $region33
    $region32: #{_evolve_gcno_forward.3} parent=1 // pred_region
      _
    $region33: #{_evolve_gcno_forward.3} parent=1 // pred_fallthru
      _
    %535 = vsyncpa [#allocation4], 1

</llo_original>
